<compile_context>
chip_gen: v7x
topology: tpu7x:2x2x1
jax: 0.10.0
libtpu: 0.0.40
codegen_flags: <defaults>
</compile_context>

<pallas_src>
import functools

import jax
import jax.numpy as jnp
from jax import lax
from jax.experimental import pallas as pl
from jax.experimental.pallas import tpu as pltpu

LN_EPS = 1e-12            # DistilBERT LayerNorm eps
MASK_BIAS = -1e9          # clamped additive mask bias (safer than finfo.min, same softmax output)
INV_SQRT2 = 0.7071067811865476
GELU_TANH_APPROX = False  # True -> tanh-approx GELU on the EUP (frees VALU on the FFN path)


def _layernorm(x, g, b):
    # x, g, b in float32; statistics in float32
    mu = jnp.mean(x, axis=-1, keepdims=True)
    var = jnp.mean((x - mu) ** 2, axis=-1, keepdims=True)
    return (x - mu) * lax.rsqrt(var + LN_EPS) * g + b


def _gelu(x):
    if GELU_TANH_APPROX:
        return jax.nn.gelu(x, approximate=True)
    # exact erf-based GELU, matching torch.nn.GELU() used by DistilBERT
    return 0.5 * x * (1.0 + lax.erf(x * INV_SQRT2))


# ---------------------------------------------------------------------------
# Kernels
# ---------------------------------------------------------------------------
def embed_ln_kernel(we_ref, pe_ref, g_ref, b_ref, out_ref):
    # we: (Bt, S, H) bf16 gathered word embeddings; pe: (1, S, H) bf16 position embeddings
    x = we_ref[...].astype(jnp.float32) + pe_ref[...].astype(jnp.float32)   # (Bt, S, H) f32
    out_ref[...] = _layernorm(x, g_ref[...], b_ref[...]).astype(out_ref.dtype)


def transformer_block_kernel(x_ref, bias_ref,
                             wqkv_ref, bqkv_ref, wo_ref, bo_ref,
                             ln1g_ref, ln1b_ref, w1_ref, b1_ref, w2_ref, b2_ref,
                             ln2g_ref, ln2b_ref,
                             out_ref, ctx_ref, *, num_heads):
    Bt, S, H = x_ref.shape
    dh = H // num_heads
    group = 2 if num_heads % 2 == 0 else 1     # head pairing -> 2*dh-lane-wide ctx stores
    gw = group * dh

    # Flatten batch rows: QKV / wo / FFN matmuls run at M = Bt*S (leading-dim merge, no copy).
    x2d = x_ref[...].reshape(Bt * S, H)        # bf16

    # Fused QKV projection: single MXU pass with N = 3H, f32 accumulation.
    # (1/sqrt(dh) scaling is already folded into wq/bq on the host.)
    qkv = jnp.dot(x2d, wqkv_ref[...], preferred_element_type=jnp.float32) + bqkv_ref[...]
    q = qkv[:, 0 * H:1 * H].astype(jnp.bfloat16)
    k = qkv[:, 1 * H:2 * H].astype(jnp.bfloat16)
    v = qkv[:, 2 * H:3 * H].astype(jnp.bfloat16)

    bias = bias_ref[...]                       # (Bt, 1, S) f32 additive mask bias

    # Per-row attention; heads processed in pairs so each scratch store is lane-dense and
    # the unrolled body count is halved.  (Converting to lax.fori_loop over pairs would
    # further bound live ranges but needs dynamic lane-dim slicing; kept static here.)
    for b in range(Bt):
        rows = slice(b * S, (b + 1) * S)
        qb, kb, vb = q[rows], k[rows], v[rows]
        bias_b = bias[b]                       # (1, S)
        for g0 in range(0, num_heads, group):
            parts = []
            for j in range(group):
                cols = slice((g0 + j) * dh, (g0 + j + 1) * dh)
                qh, kh, vh = qb[:, cols], kb[:, cols], vb[:, cols]
                s = lax.dot_general(qh, kh, (((1,), (1,)), ((), ())),   # (S, S) = qh @ kh^T
                                    preferred_element_type=jnp.float32)
                s = s + bias_b
                m = jnp.max(s, axis=-1, keepdims=True)
                p = jnp.exp(s - m)                                       # unnormalized
                l = jnp.sum(p, axis=-1, keepdims=True)
                ctx = jnp.dot(p.astype(jnp.bfloat16), vh,
                              preferred_element_type=jnp.float32)        # (S, dh) f32
                # normalize the small (S, dh) output instead of the (S, S) probabilities;
                # the divide goes to the EUP slot.
                parts.append(ctx * pl.reciprocal(l, approx=True))
            pair = parts[0] if group == 1 else jnp.concatenate(parts, axis=-1)
            ctx_ref[rows, g0 * dh:g0 * dh + gw] = pair.astype(jnp.bfloat16)

    attn_out = jnp.dot(ctx_ref[...], wo_ref[...],
                       preferred_element_type=jnp.float32) + bo_ref[...]
    sa = _layernorm(attn_out + x2d.astype(jnp.float32), ln1g_ref[...], ln1b_ref[...])   # f32
    sa_bf = sa.astype(jnp.bfloat16)

    hdn = jnp.dot(sa_bf, w1_ref[...], preferred_element_type=jnp.float32) + b1_ref[...]
    hdn = _gelu(hdn).astype(jnp.bfloat16)
    ffn = jnp.dot(hdn, w2_ref[...], preferred_element_type=jnp.float32) + b2_ref[...]
    out_ref[...] = _layernorm(ffn + sa, ln2g_ref[...], ln2b_ref[...]
                              ).reshape(Bt, S, H).astype(out_ref.dtype)


def cls_head_kernel(x_ref, w_ref, b_ref, out_ref):
    # x: (B, H) CLS rows only (sliced in the wrapper); logit as a VPU/XLU reduction,
    # avoiding a lane-sparse N=1 MXU matmul.
    pooled = x_ref[...].astype(jnp.float32)                     # (B, H)
    out_ref[...] = jnp.sum(pooled * w_ref[...], axis=-1, keepdims=True) + b_ref[...]


# ---------------------------------------------------------------------------
# Wrappers
# ---------------------------------------------------------------------------
_VMEM_SPEC = pl.BlockSpec(memory_space=pltpu.MemorySpace.VMEM)


def _vmem_limit_bytes():
    # Generation-aware scoped-VMEM budget: ~80% of physical capacity
    # (~51 MiB on v7x's 64 MiB, ~102 MiB on v5e/v6e's 128 MiB), clamped to [32, 112] MiB.
    try:
        cap = pltpu.get_tpu_info().vmem_capacity_bytes
    except Exception:
        return 48 * 1024 * 1024
    return max(32 * 1024 * 1024, min(int(cap * 0.8), 112 * 1024 * 1024))


def _const_spec(shape):
    """BlockSpec for grid-invariant (weight) inputs: constant index_map, single-buffered."""
    idx = lambda b: (0,) * len(shape)
    if hasattr(pl, "Buffered"):
        try:
            return pl.BlockSpec(shape, idx, pipeline_mode=pl.Buffered(1))
        except TypeError:
            pass
    return pl.BlockSpec(shape, idx)


def _pick_block_rows(batch):
    # rows-per-grid-step: amortize per-step overhead; keep unroll (Bt * head-pairs) modest.
    for cand in (4, 2, 1):
        if batch % cand == 0:
            return cand
    return 1


def embed_layernorm(we, pe, g, b, bt):
    B, S, H = we.shape
    return pl.pallas_call(
        embed_ln_kernel,
        grid=(B // bt,),
        in_specs=[pl.BlockSpec((bt, S, H), lambda i: (i, 0, 0)),
                  _const_spec(pe.shape),
                  _const_spec(g.shape),
                  _const_spec(b.shape)],
        out_specs=pl.BlockSpec((bt, S, H), lambda i: (i, 0, 0)),
        out_shape=jax.ShapeDtypeStruct((B, S, H), jnp.bfloat16),
        compiler_params=pltpu.CompilerParams(
            dimension_semantics=("parallel",),
            vmem_limit_bytes=_vmem_limit_bytes()),
    )(we, pe, g, b)


_LAYER_WEIGHT_ORDER = ('wqkv', 'bqkv', 'wo', 'bo', 'ln1_g', 'ln1_b',
                       'w1', 'b1', 'w2', 'b2', 'ln2_g', 'ln2_b')


def run_transformer_block(x, bias3, layer_params, num_heads, bt):
    B, S, H = x.shape
    weights = [layer_params[k] for k in _LAYER_WEIGHT_ORDER]   # all 2-D, grid-invariant
    in_specs = ([pl.BlockSpec((bt, S, H), lambda i: (i, 0, 0)),   # activations (bf16)
                 pl.BlockSpec((bt, 1, S), lambda i: (i, 0, 0))]   # additive mask bias (f32)
                + [_const_spec(w.shape) for w in weights])        # single-buffered weights
    out_specs = pl.BlockSpec((bt, S, H), lambda i: (i, 0, 0))
    return pl.pallas_call(
        functools.partial(transformer_block_kernel, num_heads=num_heads),
        grid=(B // bt,),
        in_specs=in_specs,
        out_specs=out_specs,
        out_shape=jax.ShapeDtypeStruct((B, S, H), jnp.bfloat16),
        scratch_shapes=[pltpu.VMEM((bt * S, H), jnp.bfloat16)],   # bf16 attention-context slab
        compiler_params=pltpu.CompilerParams(
            dimension_semantics=("parallel",),
            vmem_limit_bytes=_vmem_limit_bytes()),
    )(x, bias3, *weights)


def cls_head(pooled, w_row, b):
    B, H = pooled.shape
    return pl.pallas_call(
        cls_head_kernel,
        out_shape=jax.ShapeDtypeStruct((B, 1), jnp.float32),
        in_specs=[_VMEM_SPEC] * 3,
        out_specs=_VMEM_SPEC,
    )(pooled, w_row, b)


def cross_encoder_bert_forward(iparams, input_ids, attention_mask, num_heads):
    B, S = input_ids.shape
    bt = _pick_block_rows(B)
    # glue: bf16 embedding gather (XLA) -> Pallas LayerNorm
    we = jnp.take(iparams['word_emb'], input_ids, axis=0)             # (B, S, H) bf16
    pe = iparams['pos_emb'][:S][None]                                 # (1, S, H) bf16
    x = embed_layernorm(we, pe, iparams['emb_ln_g'], iparams['emb_ln_b'], bt)   # bf16
    # additive mask bias computed once (hoisted out of all kernels / head loops), clamped
    bias3 = jnp.where(attention_mask == 0, MASK_BIAS, 0.0).astype(jnp.float32).reshape(B, 1, S)
    # Deferred optimization: fold the layer loop into one pallas_call (grid=(L, B/bt)) or use
    # cross-pallas_call futures to prefetch the next layer's weights during this layer's compute.
    for lp in iparams['layers']:
        x = run_transformer_block(x, bias3, lp, num_heads, bt)
    pooled = x[:, 0, :]                                               # (B, H) CLS rows only
    return cls_head(pooled, iparams['cls_w_row'], iparams['cls_b'])   # (B, 1) f32


# ---------------------------------------------------------------------------
# Parameters: deterministic synthetic init + host-side inference packing
# ---------------------------------------------------------------------------
def init_params(key, vocab, max_pos, hidden, ffn, layers):
    def norm(k, shape, scale=0.02):
        return scale * jax.random.normal(k, shape, dtype=jnp.float32)

    keys = jax.random.split(key, 3 + layers)
    params = {
        'word_emb': norm(keys[0], (vocab, hidden)),
        'pos_emb': norm(keys[1], (max_pos, hidden)),
        'emb_ln_g': jnp.ones((1, hidden), jnp.float32),
        'emb_ln_b': jnp.zeros((1, hidden), jnp.float32),
        'cls_w': norm(keys[2], (hidden, 1)),
        'cls_b': jnp.zeros((1, 1), jnp.float32),
        'layers': [],
    }
    for l in range(layers):
        lk = jax.random.split(keys[3 + l], 6)
        params['layers'].append({
            'wq': norm(lk[0], (hidden, hidden)), 'bq': jnp.zeros((1, hidden), jnp.float32),
            'wk': norm(lk[1], (hidden, hidden)), 'bk': jnp.zeros((1, hidden), jnp.float32),
            'wv': norm(lk[2], (hidden, hidden)), 'bv': jnp.zeros((1, hidden), jnp.float32),
            'wo': norm(lk[3], (hidden, hidden)), 'bo': jnp.zeros((1, hidden), jnp.float32),
            'ln1_g': jnp.ones((1, hidden), jnp.float32), 'ln1_b': jnp.zeros((1, hidden), jnp.float32),
            'w1': norm(lk[4], (hidden, ffn)), 'b1': jnp.zeros((1, ffn), jnp.float32),
            'w2': norm(lk[5], (ffn, hidden)), 'b2': jnp.zeros((1, hidden), jnp.float32),
            'ln2_g': jnp.ones((1, hidden), jnp.float32), 'ln2_b': jnp.zeros((1, hidden), jnp.float32),
        })
    return params


def prepare_inference_params(params, num_heads):
    """Host-side one-time packing: fuse QKV, fold 1/sqrt(dh) into wq/bq, cast matmul weights
    and embedding tables to bf16.  (Checkpoint loading must go through this same packing.)"""
    hidden = params['word_emb'].shape[1]
    dh = hidden // num_heads
    scale = 1.0 / (dh ** 0.5)
    out = {
        'word_emb': params['word_emb'].astype(jnp.bfloat16),
        'pos_emb': params['pos_emb'].astype(jnp.bfloat16),
        'emb_ln_g': params['emb_ln_g'],
        'emb_ln_b': params['emb_ln_b'],
        'cls_w_row': params['cls_w'].T,        # (1, H) f32 for the VPU-reduction head
        'cls_b': params['cls_b'],              # (1, 1) f32
        'layers': [],
    }
    for lp in params['layers']:
        out['layers'].append({
            'wqkv': jnp.concatenate([lp['wq'] * scale, lp['wk'], lp['wv']], axis=1).astype(jnp.bfloat16),
            'bqkv': jnp.concatenate([lp['bq'] * scale, lp['bk'], lp['bv']], axis=1),   # f32
            'wo': lp['wo'].astype(jnp.bfloat16), 'bo': lp['bo'],
            'ln1_g': lp['ln1_g'], 'ln1_b': lp['ln1_b'],
            'w1': lp['w1'].astype(jnp.bfloat16), 'b1': lp['b1'],
            'w2': lp['w2'].astype(jnp.bfloat16), 'b2': lp['b2'],
            'ln2_g': lp['ln2_g'], 'ln2_b': lp['ln2_b'],
        })
    return out


if __name__ == "__main__":
    # small smoke-test config consistent with a DistilBERT-style encoder
    # (lane-sparse on purpose; use H/S/FFN multiples of 128 for real benchmarking)
    B, S, H, NH, FF, LAYERS = 2, 8, 32, 4, 64, 2
    VOCAB, MAX_POS = 100, 16

    key = jax.random.PRNGKey(0)
    k_params, k_ids = jax.random.split(key)
    params = init_params(k_params, VOCAB, MAX_POS, H, FF, LAYERS)
    iparams = prepare_inference_params(params, NH)

    input_ids = jax.random.randint(k_ids, (B, S), 0, VOCAB, dtype=jnp.int32)
    attention_mask = jnp.array([[1, 1, 1, 1, 1, 1, 1, 1],
                                [1, 1, 1, 1, 1, 0, 0, 0]], dtype=jnp.int32)

    logits = cross_encoder_bert_forward(iparams, input_ids, attention_mask, NH)
    logits = jax.block_until_ready(logits)
    assert logits.shape == (B, 1) and logits.dtype == jnp.float32
    # TODO(synk): tokenizer / pretrained-checkpoint loading from HF has no Pallas equivalent.
    print("KERNEL_OK")
</pallas_src>

<mosaic_0001>
module attributes {stable_mosaic.version = 11 : i64} {
  func.func @embed_ln_kernel(%arg0: i32, %arg1: memref<2x8x32xbf16, #tpu.memory_space<vmem>>, %arg2: memref<1x8x32xbf16, #tpu.memory_space<vmem>>, %arg3: memref<1x32xf32, #tpu.memory_space<vmem>>, %arg4: memref<1x32xf32, #tpu.memory_space<vmem>>, %arg5: memref<2x8x32xbf16, #tpu.memory_space<vmem>>) attributes {dimension_semantics = [#tpu.dimension_semantics<parallel>], iteration_bounds = array<i64: 1>, scalar_prefetch = 0 : i64, scratch_operands = 0 : i64, tpu.core_type = #tpu.core_type<tc>, window_params = [{transform_indices = @transform_0, window_bounds = array<i64: 2, 8, 32>}, {pipeline_mode = #tpu.pipeline_mode<synchronous>, transform_indices = @transform_1, window_bounds = array<i64: 1, 8, 32>}, {pipeline_mode = #tpu.pipeline_mode<synchronous>, transform_indices = @transform_2, window_bounds = array<i64: 1, 32>}, {pipeline_mode = #tpu.pipeline_mode<synchronous>, transform_indices = @transform_3, window_bounds = array<i64: 1, 32>}, {transform_indices = @transform_4, window_bounds = array<i64: 2, 8, 32>}]} {
    %c0 = arith.constant 0 : index
    %c0_0 = arith.constant 0 : index
    %c0_1 = arith.constant 0 : index
    %0 = vector.load %arg1[%c0, %c0_0, %c0_1] : memref<2x8x32xbf16, #tpu.memory_space<vmem>>, vector<2x8x32xbf16>
    %1 = arith.extf %0 : vector<2x8x32xbf16> to vector<2x8x32xf32>
    %c0_2 = arith.constant 0 : index
    %c0_3 = arith.constant 0 : index
    %c0_4 = arith.constant 0 : index
    %2 = vector.load %arg2[%c0_2, %c0_3, %c0_4] : memref<1x8x32xbf16, #tpu.memory_space<vmem>>, vector<1x8x32xbf16>
    %3 = arith.extf %2 : vector<1x8x32xbf16> to vector<1x8x32xf32>
    %4 = vector.broadcast %3 : vector<1x8x32xf32> to vector<2x8x32xf32>
    %5 = arith.addf %1, %4 : vector<2x8x32xf32>
    %c0_5 = arith.constant 0 : index
    %c0_6 = arith.constant 0 : index
    %6 = vector.load %arg3[%c0_5, %c0_6] : memref<1x32xf32, #tpu.memory_space<vmem>>, vector<1x32xf32>
    %c0_7 = arith.constant 0 : index
    %c0_8 = arith.constant 0 : index
    %7 = vector.load %arg4[%c0_7, %c0_8] : memref<1x32xf32, #tpu.memory_space<vmem>>, vector<1x32xf32>
    %cst = arith.constant dense<0.000000e+00> : vector<2x8xf32>
    %8 = vector.multi_reduction <add>, %5, %cst [2] : vector<2x8x32xf32> to vector<2x8xf32>
    %9 = vector.shape_cast %8 : vector<2x8xf32> to vector<2x8x1xf32>
    %cst_9 = arith.constant 3.200000e+01 : f32
    %10 = vector.broadcast %cst_9 : f32 to vector<2x8x1xf32>
    %11 = arith.divf %9, %10 : vector<2x8x1xf32>
    %12 = vector.broadcast %11 : vector<2x8x1xf32> to vector<2x8x32xf32>
    %13 = arith.subf %5, %12 : vector<2x8x32xf32>
    %14 = arith.mulf %13, %13 : vector<2x8x32xf32>
    %cst_10 = arith.constant dense<0.000000e+00> : vector<2x8xf32>
    %15 = vector.multi_reduction <add>, %14, %cst_10 [2] : vector<2x8x32xf32> to vector<2x8xf32>
    %16 = vector.shape_cast %15 : vector<2x8xf32> to vector<2x8x1xf32>
    %cst_11 = arith.constant 3.200000e+01 : f32
    %17 = vector.broadcast %cst_11 : f32 to vector<2x8x1xf32>
    %18 = arith.divf %16, %17 : vector<2x8x1xf32>
    %19 = vector.broadcast %11 : vector<2x8x1xf32> to vector<2x8x32xf32>
    %20 = arith.subf %5, %19 : vector<2x8x32xf32>
    %cst_12 = arith.constant 9.99999996E-13 : f32
    %21 = vector.broadcast %cst_12 : f32 to vector<2x8x1xf32>
    %22 = arith.addf %18, %21 : vector<2x8x1xf32>
    %23 = math.rsqrt %22 : vector<2x8x1xf32>
    %24 = vector.broadcast %23 : vector<2x8x1xf32> to vector<2x8x32xf32>
    %25 = arith.mulf %20, %24 : vector<2x8x32xf32>
    %26 = vector.shape_cast %6 : vector<1x32xf32> to vector<1x1x32xf32>
    %27 = vector.broadcast %26 : vector<1x1x32xf32> to vector<2x8x32xf32>
    %28 = arith.mulf %25, %27 : vector<2x8x32xf32>
    %29 = vector.shape_cast %7 : vector<1x32xf32> to vector<1x1x32xf32>
    %30 = vector.broadcast %29 : vector<1x1x32xf32> to vector<2x8x32xf32>
    %31 = arith.addf %28, %30 : vector<2x8x32xf32>
    %32 = arith.truncf %31 : vector<2x8x32xf32> to vector<2x8x32xbf16>
    %c0_13 = arith.constant 0 : index
    %c0_14 = arith.constant 0 : index
    %c0_15 = arith.constant 0 : index
    %33 = vector.load %arg5[%c0_13, %c0_14, %c0_15] : memref<2x8x32xbf16, #tpu.memory_space<vmem>>, vector<2x8x32xbf16>
    tpu.vector_store %arg5[%c0_13, %c0_14, %c0_15], %32 {strides = array<i32>} : memref<2x8x32xbf16, #tpu.memory_space<vmem>>, vector<2x8x32xbf16>,
    return
  }
  func.func @transform_0(%arg0: i32) -> (i32, i32, i32) {
    %c0_i32 = arith.constant 0 : i32
    %c0_i32_0 = arith.constant 0 : i32
    %c0_i32_1 = arith.constant 0 : i32
    return %arg0, %c0_i32, %c0_i32_0 : i32, i32, i32
  }
  func.func @transform_1(%arg0: i32) -> (i32, i32, i32) {
    %c0_i32 = arith.constant 0 : i32
    %c0_i32_0 = arith.constant 0 : i32
    %c0_i32_1 = arith.constant 0 : i32
    %c0_i32_2 = arith.constant 0 : i32
    return %c0_i32, %c0_i32_0, %c0_i32_1 : i32, i32, i32
  }
  func.func @transform_2(%arg0: i32) -> (i32, i32) {
    %c0_i32 = arith.constant 0 : i32
    %c0_i32_0 = arith.constant 0 : i32
    %c0_i32_1 = arith.constant 0 : i32
    return %c0_i32, %c0_i32_0 : i32, i32
  }
  func.func @transform_3(%arg0: i32) -> (i32, i32) {
    %c0_i32 = arith.constant 0 : i32
    %c0_i32_0 = arith.constant 0 : i32
    %c0_i32_1 = arith.constant 0 : i32
    return %c0_i32, %c0_i32_0 : i32, i32
  }
  func.func @transform_4(%arg0: i32) -> (i32, i32, i32) {
    %c0_i32 = arith.constant 0 : i32
    %c0_i32_0 = arith.constant 0 : i32
    %c0_i32_1 = arith.constant 0 : i32
    return %arg0, %c0_i32, %c0_i32_0 : i32, i32, i32
  }
}

</mosaic_0001>

<llo_original>
// kernel: tpu_custom_call.1
$region0: #{tpu_custom_call.1}
  #allocation0 [shape = 'u32[]', space=smem, size = 0x4, offset = 0x4, fixed_abs, tag = 'smem constant byte address 0x4 - core index']
  #allocation1 [shape = 'u32[144,128]{1,0:T(1,128)}', space=vmem, size = 0x12000, scoped, tag = 'internal scratch']
  %s0 = inlined_call_operand.hbm [shape: bf16[2,8,32], index: 0, kind: input, shape index: {}]
  %s1 = inlined_call_operand.hbm [shape: bf16[1,8,32], index: 1, kind: input, shape index: {}]
  %s2 = inlined_call_operand.vmem [shape: f32[1,32], index: 2, kind: input, shape index: {}]
  %s3 = inlined_call_operand.vmem [shape: f32[1,32], index: 3, kind: input, shape index: {}]
  %s4 = inlined_call_operand.hbm [shape: bf16[2,8,32], index: 4, kind: output, shape index: {}]
  %s5 = sld [smem:[#allocation0]]
  $region34: #{tpu_custom_call.1} parent=0
    _
  %s7 = ssub.s32 1, %s5
  %s8 = scalar_select 0, %s7, %s5
  $region1: #{tpu_custom_call.1} parent=0
    #allocation2 [shape = 'u8[4096]{0}', space=vmem, size = 0x1000, scoped, tag = 'input window, operand 0, single buffered']
    #allocation3 [shape = 's32[1]{0}', space=sflag, size = 0x4, scoped, tag = 'scoped memory for tpu_custom_call.1']
    #allocation4 [shape = 's32[1]{0}', space=sflag, size = 0x4, scoped, tag = 'scoped memory for tpu_custom_call.1']
    #allocation5 [shape = 'u8[2048]{0}', space=vmem, size = 0x800, scoped, tag = 'input window, operand 1, single buffered']
    #allocation6 [shape = 's32[1]{0}', space=sflag, size = 0x4, scoped, tag = 'scoped memory for tpu_custom_call.1']
    #allocation7 [shape = 'u8[4096]{0}', space=vmem, size = 0x1000, scoped, tag = 'output window, operand 0, single buffered']
    %9 = vsyncpa [#allocation3], 0
    %10 = vsyncpa [#allocation6], 0
    %11 = vsyncpa [#allocation4], 0
    // Predicated region
    $region2: #{tpu_custom_call.1} parent=1 // pred_check
      _
    $region3: #{tpu_custom_call.1} parent=1 // pred_check_branch
      %13 = sbr.rel (0) target = $region5
    $region4: #{tpu_custom_call.1} parent=1 // pred_region
      %s15 = ssub.s32 128, 128
      %16 = vsyncadd [#allocation3], %s15
      %s17 = sshll.u32 [#allocation2], 4
      %s18 = int_to_ptr.vmem [resolvable:$true] %s17
      %23 = dma.hbm_to_vmem [thread:$0]  %s0, 128, %s18, [#allocation3], 64, 64, 4
    $region5: #{tpu_custom_call.1} parent=1 // pred_fallthru
      _
    // Predicated region
    $region6: #{tpu_custom_call.1} parent=1 // pred_check
      _
    $region7: #{tpu_custom_call.1} parent=1 // pred_check_branch
      %25 = sbr.rel (0) target = $region9
    $region8: #{tpu_custom_call.1} parent=1 // pred_region
      %s27 = ssub.s32 64, 64
      %28 = vsyncadd [#allocation6], %s27
      %s30 = sshll.u32 [#allocation5], 4
      %s31 = int_to_ptr.vmem [resolvable:$true] %s30
      %33 = dma.hbm_to_vmem [thread:$0]  %s1, 64, %s31, [#allocation6]
    $region9: #{tpu_custom_call.1} parent=1 // pred_fallthru
      _
    // Predicated region
    $region10: #{tpu_custom_call.1} parent=1 // pred_check
      _
    $region11: #{tpu_custom_call.1} parent=1 // pred_check_branch
      %35 = sbr.rel (0) target = $region13
    $region12: #{tpu_custom_call.1} parent=1 // pred_region
      _
    $region13: #{tpu_custom_call.1} parent=1 // pred_fallthru
      _
    // Predicated region
    $region14: #{tpu_custom_call.1} parent=1 // pred_check
      _
    $region15: #{tpu_custom_call.1} parent=1 // pred_check_branch
      %37 = sbr.rel (0) target = $region17
    $region16: #{tpu_custom_call.1} parent=1 // pred_region
      _
    $region17: #{tpu_custom_call.1} parent=1 // pred_fallthru
      _
    // Predicated region
    $region18: #{tpu_custom_call.1} parent=1 // pred_check
      _
    $region19: #{tpu_custom_call.1} parent=1 // pred_check_branch
      %39 = sbr.rel (0) target = $region21
    $region20: #{tpu_custom_call.1} parent=1 // pred_region
      %40 = dma.done [#allocation3], 128
    $region21: #{tpu_custom_call.1} parent=1 // pred_fallthru
      _
    // Predicated region
    $region22: #{tpu_custom_call.1} parent=1 // pred_check
      _
    $region23: #{tpu_custom_call.1} parent=1 // pred_check_branch
      %42 = sbr.rel (0) target = $region25
    $region24: #{tpu_custom_call.1} parent=1 // pred_region
      %43 = dma.done [#allocation6], 64
    $region25: #{tpu_custom_call.1} parent=1 // pred_fallthru
      _
    %v44 = vld [vmem:[#allocation2] sm:$0xf]
    %v45 = vld [vmem:[#allocation2 + $0x4] sm:$0xf]
    %v46 = vunpack.c.l.bf16 %v44
    %v47 = vunpack.c.l.bf16 %v45
    %v48 = vld [vmem:[#allocation5] sm:$0xf]
    %v49 = vunpack.c.l.bf16 %v48
    %v50 = vadd.f32 %v46, %v49
    %v51 = vadd.f32 %v47, %v49
    %v52 = vld [vmem:[%s2] sm:$0x1]
    %v53 = vld [vmem:[%s3] sm:$0x1]
    %vm54 = vcmask 261120
    %v55 = vsel %vm54, %v50, 0.0
    %56 = vadd.xlane.f32.xlu0 %v55
    %v57 = vpop.xlane.xlu0 %56
    %v58 = vsel %vm54, %v51, 0.0
    %59 = vadd.xlane.f32.xlu0 %v58
    %v60 = vpop.xlane.xlu0 %59
    %v61 = vrcp.pop 32.0
    %v62 = vmul.f32 %v57, %v61
    %v63 = vmul.f32 %v60, %v61
    %v64 = vsub.f32 %v50, %v62
    %v65 = vsub.f32 %v51, %v63
    %v66 = vmul.f32 %v64, %v64
    %v67 = vmul.f32 %v65, %v65
    %v68 = vsel %vm54, %v66, 0.0
    %69 = vadd.xlane.f32.xlu0 %v68
    %v70 = vpop.xlane.xlu0 %69
    %v71 = vsel %vm54, %v67, 0.0
    %72 = vadd.xlane.f32.xlu0 %v71
    %v73 = vpop.xlane.xlu0 %72
    %v74 = vmul.f32 %v70, %v61
    %v75 = vmul.f32 %v73, %v61
    %v76 = vadd.f32 %v74, 1e-12
    %v77 = vadd.f32 %v75, 1e-12
    %v78 = vrsqrt.pop %v76
    %v79 = vrsqrt.pop %v77
    %v80 = vmul.f32 %v64, %v78
    %v81 = vmul.f32 %v65, %v79
    %v83 = vlaneseq
    %v84 = vshrl.u32 %v83, 7
    %v85 = vsub.s32 0, %v84
    %v86 = vrot.slane %v52, %v85
    %v88 = vmul.f32 %v80, %v86
    %v89 = vmul.f32 %v81, %v86
    %v91 = vlaneseq
    %v92 = vshrl.u32 %v91, 7
    %v93 = vsub.s32 0, %v92
    %v94 = vrot.slane %v53, %v93
    %v96 = vadd.f32 %v88, %v94
    %v97 = vadd.f32 %v89, %v94
    %v98 = vpack.c.bf16 %v96, %v96
    %v99 = vpack.c.bf16 %v97, %v97
    %vm100 = vcmask 257024
    %101 = vst.msk [vmem:[#allocation7] sm:$0xf] %vm100, %v98
    %102 = vst.msk [vmem:[#allocation7 + $0x4] sm:$0xf] %vm100, %v99
    // Predicated region
    $region26: #{tpu_custom_call.1} parent=1 // pred_check
      _
    $region27: #{tpu_custom_call.1} parent=1 // pred_check_branch
      %104 = sbr.rel (0) target = $region29
    $region28: #{tpu_custom_call.1} parent=1 // pred_region
      %s106 = ssub.s32 128, 128
      %107 = vsyncadd [#allocation4], %s106
      %s108 = sshll.u32 [#allocation7], 4
      %s109 = int_to_ptr.vmem [resolvable:$true] %s108
      %114 = dma.vmem_to_hbm [thread:$0]  %s109, 128, %s4, [#allocation4], 64, 64, 4
    $region29: #{tpu_custom_call.1} parent=1 // pred_fallthru
      _
    // Predicated region
    $region30: #{tpu_custom_call.1} parent=1 // pred_check
      _
    $region31: #{tpu_custom_call.1} parent=1 // pred_check_branch
      %116 = sbr.rel (0) target = $region33
    $region32: #{tpu_custom_call.1} parent=1 // pred_region
      %117 = dma.done [#allocation4], 128
    $region33: #{tpu_custom_call.1} parent=1 // pred_fallthru
      _
    %118 = vsyncpa [#allocation3], 1
    %119 = vsyncpa [#allocation6], 1
    %120 = vsyncpa [#allocation4], 1

</llo_original>
